<compile_context>
chip_gen: v7x
topology: tpu7x:2x2x1
jax: 0.10.0
libtpu: 0.0.40
codegen_flags: <defaults>
</compile_context>

<pallas_src>
import math
from functools import partial

import jax
import jax.numpy as jnp
from jax import lax
from jax.experimental import pallas as pl
from jax.experimental.pallas import tpu as pltpu

LN_EPS = 1e-5
_VMEM_LIMIT_BYTES = 32 * 1024 * 1024   # conservative; safe on v5e/v6e/v7x


def _layer_norm(x, gamma, beta):
    mu = jnp.mean(x, axis=-1, keepdims=True)
    var = jnp.mean(jnp.square(x - mu), axis=-1, keepdims=True)
    return (x - mu) * lax.rsqrt(var + LN_EPS) * gamma + beta


def _feat2d_bias_kernel(act_ref, gamma_ref, beta_ref, wfbt_ref, nb_ref):
    """Row-shared non-batched bias: nb[h, q, k] = LN(act)[q, k, :] @ w_fb[:, h]."""
    x = act_ref[0]                                            # [TQ, N, C]
    ln = _layer_norm(x, gamma_ref[0][None, None, :], beta_ref[0][None, None, :])
    wfbt = wfbt_ref[...]                                      # [H, C]
    num_heads = wfbt.shape[0]
    for hh in range(num_heads):
        # Lane-dim (C) multiply-reduce per head; avoids a narrow [*, H] matmul
        # store and any in-kernel transpose of the [H, q, k] output layout.
        nb_ref[0, hh] = jnp.sum(ln * wfbt[hh][None, None, :],
                                axis=-1).astype(nb_ref.dtype)


def _attn_kernel(num_heads, head_dim, mxu_dtype, approx_recip,
                 act_ref, mask_ref, nb_ref, gamma_ref, beta_ref,
                 wqkvg_ref, bg_ref, wo_ref, bo_ref, out_ref):
    hd = num_heads * head_dim
    x = act_ref[0]                                            # [TI, N, C]
    ti, n, c = x.shape
    mask = mask_ref[0]                                        # [TI, N]
    nb = nb_ref[0]                                            # [H, N, N] (compute dtype)

    # LayerNorm over channels (f32).
    ln = _layer_norm(x, gamma_ref[0][None, None, :], beta_ref[0][None, None, :])
    lnf = ln.reshape(ti * n, c).astype(mxu_dtype)

    # One fused lane-dense projection: [TI*N, C] @ [C, 4*H*D]
    # (1/sqrt(D) query scaling already folded into the q columns).
    qkvg = jnp.dot(lnf, wqkvg_ref[...], preferred_element_type=jnp.float32)

    gate = jax.nn.sigmoid(qkvg[:, 3 * hd:4 * hd] + bg_ref[0][None, :])   # [TI*N, HD]
    mask_bias = (1e9 * (mask - 1.0))[:, None, :]                         # [TI, 1, N]
    wo = wo_ref[...]                                                     # [HD, C]

    # Per-head attention; output projection accumulated per head (no concat).
    # TODO(synk): for very large N add flash-style online-softmax tiling over
    # the key axis; logits are currently materialized as [TI, N, N] per head.
    out_acc = jnp.broadcast_to(bo_ref[0][None, :], (ti * n, c)).astype(jnp.float32)
    for hh in range(num_heads):
        lo = hh * head_dim
        q = qkvg[:, lo:lo + head_dim].reshape(ti, n, head_dim)
        k = qkvg[:, hd + lo:hd + lo + head_dim].reshape(ti, n, head_dim)
        v = qkvg[:, 2 * hd + lo:2 * hd + lo + head_dim].reshape(ti, n, head_dim)

        logits = jnp.einsum('iqd,ikd->iqk',
                            q.astype(mxu_dtype), k.astype(mxu_dtype),
                            preferred_element_type=jnp.float32)          # [TI, N, N]
        logits = logits + mask_bias + nb[hh][None, :, :]

        m = jnp.max(logits, axis=-1, keepdims=True)
        p = jnp.exp(logits - m)
        a = p * pl.reciprocal(jnp.sum(p, axis=-1, keepdims=True),
                              approx=approx_recip)

        o = jnp.einsum('iqk,ikd->iqd',
                       a.astype(mxu_dtype), v.astype(mxu_dtype),
                       preferred_element_type=jnp.float32)               # [TI, N, D]
        og = (o.reshape(ti * n, head_dim) * gate[:, lo:lo + head_dim]).astype(mxu_dtype)
        out_acc = out_acc + jnp.dot(og, wo[lo:lo + head_dim, :],
                                    preferred_element_type=jnp.float32)

    out_ref[0] = out_acc.reshape(ti, n, c)


def _pick_row_tile(n, c, h, d, nb_itemsize, max_tile=128,
                   vmem_budget=_VMEM_LIMIT_BYTES):
    """Largest VMEM-fitting divisor of n that is sublane/packing friendly."""
    hd = h * d
    sub = 16 if nb_itemsize < 4 else 8     # packed sublane quantum for the nb store

    def est_bytes(t):
        # double-buffered pipeline blocks (attention kernel dominates)
        blk = 2 * (t * n * c * 4)              # act in
        blk += 2 * (t * n * 4)                 # mask in
        blk += 2 * (h * n * n * nb_itemsize)   # non-batched bias in
        blk += 2 * (t * n * c * 4)             # out
        # rough upper bound on live in-kernel temporaries
        inner = t * n * c * 4 * 2              # ln + cast copy
        inner += t * n * (4 * hd) * 4          # fused qkvg projection (f32)
        inner += t * n * n * 4 * 3             # logits / exp / softmax (one head live)
        inner += t * n * hd * 4                # gate
        inner += t * n * c * 4                 # output accumulator
        return blk + inner

    valid = [t for t in range(min(n, max_tile), 0, -1)
             if n % t == 0 and (t == n or t % sub == 0)]
    if not valid:
        return n
    for t in valid:
        if est_bytes(t) <= vmem_budget:
            return t
    return valid[-1]                        # smallest legal tile; best effort


def _rep_spec(shape):
    nd = len(shape)
    return pl.BlockSpec(shape, lambda *_, _nd=nd: (0,) * _nd)


def triangle_attention_starting_node(act, mask, params,
                                     compute_dtype=jnp.bfloat16):
    """act: [B, N, N, C] f32, mask: [B, N, N] f32 (0/1)."""
    B, N, _, C = act.shape
    H = params['w_fb'].shape[1]
    HD = params['w_q'].shape[1]
    D = HD // H

    nb_dtype = compute_dtype
    nb_itemsize = jnp.zeros((), nb_dtype).dtype.itemsize
    TI = _pick_row_tile(N, C, H, D, nb_itemsize)
    NI = N // TI
    approx_recip = (nb_itemsize < 4)       # exact reciprocal on the f32 path

    # ---- tiny parameter prep (done once, outside the hot path) -------------
    gamma = params['ln_gamma'].reshape(1, C).astype(jnp.float32)
    beta = params['ln_beta'].reshape(1, C).astype(jnp.float32)
    w_qkvg = jnp.concatenate(
        [params['w_q'] * (1.0 / math.sqrt(D)), params['w_k'],
         params['w_v'], params['w_g']], axis=1).astype(compute_dtype)    # [C, 4*H*D]
    b_g = params['b_g'].reshape(1, HD).astype(jnp.float32)
    w_o = params['w_o'].astype(compute_dtype)                            # [HD, C]
    b_o = params['b_o'].reshape(1, C).astype(jnp.float32)
    w_fb_t = jnp.transpose(params['w_fb']).astype(jnp.float32)           # [H, C]

    cparams = pltpu.CompilerParams(
        dimension_semantics=("parallel", "parallel"),
        vmem_limit_bytes=_VMEM_LIMIT_BYTES)

    # ---- kernel 1: row-shared non-batched triangle bias [B, H, N, N] -------
    nb = pl.pallas_call(
        _feat2d_bias_kernel,
        grid=(B, NI),
        in_specs=[
            pl.BlockSpec((1, TI, N, C), lambda b, q: (b, q, 0, 0)),
            _rep_spec((1, C)), _rep_spec((1, C)), _rep_spec((H, C)),
        ],
        out_specs=pl.BlockSpec((1, H, TI, N), lambda b, q: (b, 0, q, 0)),
        out_shape=jax.ShapeDtypeStruct((B, H, N, N), nb_dtype),
        compiler_params=cparams,
    )(act, gamma, beta, w_fb_t)

    # ---- kernel 2: per-row gated attention ----------------------------------
    out = pl.pallas_call(
        partial(_attn_kernel, H, D, compute_dtype, approx_recip),
        grid=(B, NI),
        in_specs=[
            pl.BlockSpec((1, TI, N, C), lambda b, i: (b, i, 0, 0)),
            pl.BlockSpec((1, TI, N), lambda b, i: (b, i, 0)),
            pl.BlockSpec((1, H, N, N), lambda b, i: (b, 0, 0, 0)),
            _rep_spec((1, C)), _rep_spec((1, C)),
            _rep_spec((C, 4 * HD)), _rep_spec((1, HD)),
            _rep_spec((HD, C)), _rep_spec((1, C)),
        ],
        out_specs=pl.BlockSpec((1, TI, N, C), lambda b, i: (b, i, 0, 0)),
        out_shape=jax.ShapeDtypeStruct((B, N, N, C), jnp.float32),
        compiler_params=cparams,
    )(act, mask, nb, gamma, beta, w_qkvg, b_g, w_o, b_o)

    # dropout_rate == 0  ->  Identity
    return out


def _reference(act, mask, p):
    """Pure-JAX reference of the StartingNode forward (for validation)."""
    C = act.shape[-1]
    H = p['w_fb'].shape[1]
    D = p['w_q'].shape[1] // H
    mu = jnp.mean(act, -1, keepdims=True)
    var = jnp.var(act, -1, keepdims=True)
    ln = (act - mu) / jnp.sqrt(var + LN_EPS) * p['ln_gamma'][0] + p['ln_beta'][0]
    bias = (1e9 * (mask - 1.0))[:, :, None, None, :]                # [B,I,1,1,K]
    nb = jnp.einsum('bqkc,ch->bhqk', ln, p['w_fb'])[:, None]        # [B,1,H,Q,K]
    q = jnp.einsum('bijc,chd->bijhd', ln, p['w_q'].reshape(C, H, D)) / math.sqrt(D)
    k = jnp.einsum('bijc,chd->bijhd', ln, p['w_k'].reshape(C, H, D))
    v = jnp.einsum('bijc,chd->bijhd', ln, p['w_v'].reshape(C, H, D))
    logits = jnp.einsum('biqhd,bikhd->bihqk', q, k) + bias + nb
    a = jax.nn.softmax(logits, axis=-1)
    o = jnp.einsum('bihqk,bikhd->biqhd', a, v)
    g = jax.nn.sigmoid(
        jnp.einsum('bijc,chd->bijhd', ln, p['w_g'].reshape(C, H, D))
        + p['b_g'][0].reshape(H, D))
    o = o * g
    return jnp.einsum('bijhd,hdc->bijc', o, p['w_o'].reshape(H, D, C)) + p['b_o'][0]


if __name__ == "__main__":
    # config: norm_channel=32, attention_channel=8, num_head=4, dropout_rate=0
    B, N, C, H, D = 2, 8, 32, 4, 8
    key = jax.random.PRNGKey(0)
    ks = jax.random.split(key, 12)

    act = jax.random.normal(ks[0], (B, N, N, C), jnp.float32)
    mask = (jax.random.uniform(ks[1], (B, N, N)) > 0.2).astype(jnp.float32)

    params = {
        'ln_gamma': 1.0 + 0.1 * jax.random.normal(ks[2], (1, C), jnp.float32),
        'ln_beta': 0.1 * jax.random.normal(ks[3], (1, C), jnp.float32),
        'w_fb': 0.1 * jax.random.normal(ks[4], (C, H), jnp.float32),
        'w_q': 0.1 * jax.random.normal(ks[5], (C, H * D), jnp.float32),
        'w_k': 0.1 * jax.random.normal(ks[6], (C, H * D), jnp.float32),
        'w_v': 0.1 * jax.random.normal(ks[7], (C, H * D), jnp.float32),
        'w_g': 0.1 * jax.random.normal(ks[8], (C, H * D), jnp.float32),
        'b_g': jnp.ones((1, H * D), jnp.float32),
        'w_o': 0.1 * jax.random.normal(ks[9], (H * D, C), jnp.float32),
        'b_o': 0.05 * jax.random.normal(ks[10], (1, C), jnp.float32),
    }

    # default fast path: bf16 MXU operands / bias, f32 accumulation
    out_bf16 = jax.block_until_ready(
        triangle_attention_starting_node(act, mask, params))
    # bit-accurate checking path: pure f32
    out_f32 = jax.block_until_ready(
        triangle_attention_starting_node(act, mask, params,
                                         compute_dtype=jnp.float32))

    ref = _reference(act, mask, params)
    assert out_bf16.shape == (B, N, N, C)
    err_f32 = float(jnp.max(jnp.abs(out_f32 - ref)))
    err_bf16 = float(jnp.max(jnp.abs(out_bf16 - ref)))
    assert jnp.allclose(out_f32, ref, atol=3e-3, rtol=3e-3), \
        f"f32 mismatch vs reference (max abs err {err_f32})"
    assert jnp.allclose(out_bf16, ref, atol=5e-2, rtol=5e-2), \
        f"bf16 mismatch vs reference (max abs err {err_bf16})"

    print("KERNEL_OK")
</pallas_src>

<mosaic_0001>
module attributes {stable_mosaic.version = 11 : i64} {
  func.func @_feat2d_bias_kernel(%arg0: i32, %arg1: i32, %arg2: memref<1x8x8x32xf32, #tpu.memory_space<vmem>>, %arg3: memref<1x32xf32, #tpu.memory_space<vmem>>, %arg4: memref<1x32xf32, #tpu.memory_space<vmem>>, %arg5: memref<4x32xf32, #tpu.memory_space<vmem>>, %arg6: memref<1x4x8x8xbf16, #tpu.memory_space<vmem>>) attributes {dimension_semantics = [#tpu.dimension_semantics<parallel>, #tpu.dimension_semantics<parallel>], iteration_bounds = array<i64: 2, 1>, scalar_prefetch = 0 : i64, scratch_operands = 0 : i64, tpu.core_type = #tpu.core_type<tc>, window_params = [{transform_indices = @transform_0, window_bounds = array<i64: 1, 8, 8, 32>}, {pipeline_mode = #tpu.pipeline_mode<synchronous>, transform_indices = @transform_1, window_bounds = array<i64: 1, 32>}, {pipeline_mode = #tpu.pipeline_mode<synchronous>, transform_indices = @transform_2, window_bounds = array<i64: 1, 32>}, {pipeline_mode = #tpu.pipeline_mode<synchronous>, transform_indices = @transform_3, window_bounds = array<i64: 4, 32>}, {transform_indices = @transform_4, window_bounds = array<i64: 1, 4, 8, 8>}]} {
    %c0 = arith.constant 0 : index
    %c0_0 = arith.constant 0 : index
    %c0_1 = arith.constant 0 : index
    %c0_2 = arith.constant 0 : index
    %0 = vector.load %arg2[%c0, %c0_0, %c0_1, %c0_2] : memref<1x8x8x32xf32, #tpu.memory_space<vmem>>, vector<1x8x8x32xf32>
    %1 = vector.shape_cast %0 : vector<1x8x8x32xf32> to vector<8x8x32xf32>
    %c0_3 = arith.constant 0 : index
    %c0_4 = arith.constant 0 : index
    %2 = vector.load %arg3[%c0_3, %c0_4] : memref<1x32xf32, #tpu.memory_space<vmem>>, vector<1x32xf32>
    %3 = vector.shape_cast %2 : vector<1x32xf32> to vector<32xf32>
    %4 = vector.shape_cast %3 : vector<32xf32> to vector<1x1x32xf32>
    %c0_5 = arith.constant 0 : index
    %c0_6 = arith.constant 0 : index
    %5 = vector.load %arg4[%c0_5, %c0_6] : memref<1x32xf32, #tpu.memory_space<vmem>>, vector<1x32xf32>
    %6 = vector.shape_cast %5 : vector<1x32xf32> to vector<32xf32>
    %7 = vector.shape_cast %6 : vector<32xf32> to vector<1x1x32xf32>
    %cst = arith.constant dense<0.000000e+00> : vector<8x8xf32>
    %8 = vector.multi_reduction <add>, %1, %cst [2] : vector<8x8x32xf32> to vector<8x8xf32>
    %9 = vector.shape_cast %8 : vector<8x8xf32> to vector<8x8x1xf32>
    %cst_7 = arith.constant 3.200000e+01 : f32
    %10 = vector.broadcast %cst_7 : f32 to vector<8x8x1xf32>
    %11 = arith.divf %9, %10 : vector<8x8x1xf32>
    %12 = vector.broadcast %11 : vector<8x8x1xf32> to vector<8x8x32xf32>
    %13 = arith.subf %1, %12 : vector<8x8x32xf32>
    %14 = arith.mulf %13, %13 : vector<8x8x32xf32>
    %cst_8 = arith.constant dense<0.000000e+00> : vector<8x8xf32>
    %15 = vector.multi_reduction <add>, %14, %cst_8 [2] : vector<8x8x32xf32> to vector<8x8xf32>
    %16 = vector.shape_cast %15 : vector<8x8xf32> to vector<8x8x1xf32>
    %cst_9 = arith.constant 3.200000e+01 : f32
    %17 = vector.broadcast %cst_9 : f32 to vector<8x8x1xf32>
    %18 = arith.divf %16, %17 : vector<8x8x1xf32>
    %19 = vector.broadcast %11 : vector<8x8x1xf32> to vector<8x8x32xf32>
    %20 = arith.subf %1, %19 : vector<8x8x32xf32>
    %cst_10 = arith.constant 9.99999974E-6 : f32
    %21 = vector.broadcast %cst_10 : f32 to vector<8x8x1xf32>
    %22 = arith.addf %18, %21 : vector<8x8x1xf32>
    %23 = math.rsqrt %22 : vector<8x8x1xf32>
    %24 = vector.broadcast %23 : vector<8x8x1xf32> to vector<8x8x32xf32>
    %25 = arith.mulf %20, %24 : vector<8x8x32xf32>
    %26 = vector.broadcast %4 : vector<1x1x32xf32> to vector<8x8x32xf32>
    %27 = arith.mulf %25, %26 : vector<8x8x32xf32>
    %28 = vector.broadcast %7 : vector<1x1x32xf32> to vector<8x8x32xf32>
    %29 = arith.addf %27, %28 : vector<8x8x32xf32>
    %c0_11 = arith.constant 0 : index
    %c0_12 = arith.constant 0 : index
    %30 = vector.load %arg5[%c0_11, %c0_12] : memref<4x32xf32, #tpu.memory_space<vmem>>, vector<4x32xf32>
    %31 = vector.extract_strided_slice %30 {offsets = [0, 0], sizes = [1, 32], strides = [1, 1]} : vector<4x32xf32> to vector<1x32xf32>
    %32 = vector.shape_cast %31 : vector<1x32xf32> to vector<32xf32>
    %33 = vector.shape_cast %32 : vector<32xf32> to vector<1x1x32xf32>
    %34 = vector.broadcast %33 : vector<1x1x32xf32> to vector<8x8x32xf32>
    %35 = arith.mulf %29, %34 : vector<8x8x32xf32>
    %cst_13 = arith.constant dense<0.000000e+00> : vector<8x8xf32>
    %36 = vector.multi_reduction <add>, %35, %cst_13 [2] : vector<8x8x32xf32> to vector<8x8xf32>
    %37 = arith.truncf %36 : vector<8x8xf32> to vector<8x8xbf16>
    %c0_14 = arith.constant 0 : index
    %c0_15 = arith.constant 0 : index
    %c0_16 = arith.constant 0 : index
    %c0_17 = arith.constant 0 : index
    %38 = vector.load %arg6[%c0_14, %c0_15, %c0_16, %c0_17] : memref<1x4x8x8xbf16, #tpu.memory_space<vmem>>, vector<1x1x8x8xbf16>
    %39 = vector.shape_cast %38 : vector<1x1x8x8xbf16> to vector<8x8xbf16>
    %40 = vector.shape_cast %37 : vector<8x8xbf16> to vector<1x1x8x8xbf16>
    tpu.vector_store %arg6[%c0_14, %c0_15, %c0_16, %c0_17], %40 {strides = array<i32>} : memref<1x4x8x8xbf16, #tpu.memory_space<vmem>>, vector<1x1x8x8xbf16>,
    %41 = vector.extract_strided_slice %30 {offsets = [1, 0], sizes = [1, 32], strides = [1, 1]} : vector<4x32xf32> to vector<1x32xf32>
    %42 = vector.shape_cast %41 : vector<1x32xf32> to vector<32xf32>
    %43 = vector.shape_cast %42 : vector<32xf32> to vector<1x1x32xf32>
    %44 = vector.broadcast %43 : vector<1x1x32xf32> to vector<8x8x32xf32>
    %45 = arith.mulf %29, %44 : vector<8x8x32xf32>
    %cst_18 = arith.constant dense<0.000000e+00> : vector<8x8xf32>
    %46 = vector.multi_reduction <add>, %45, %cst_18 [2] : vector<8x8x32xf32> to vector<8x8xf32>
    %47 = arith.truncf %46 : vector<8x8xf32> to vector<8x8xbf16>
    %c0_19 = arith.constant 0 : index
    %c1 = arith.constant 1 : index
    %c0_20 = arith.constant 0 : index
    %c0_21 = arith.constant 0 : index
    %48 = vector.load %arg6[%c0_19, %c1, %c0_20, %c0_21] : memref<1x4x8x8xbf16, #tpu.memory_space<vmem>>, vector<1x1x8x8xbf16>
    %49 = vector.shape_cast %48 : vector<1x1x8x8xbf16> to vector<8x8xbf16>
    %50 = vector.shape_cast %47 : vector<8x8xbf16> to vector<1x1x8x8xbf16>
    tpu.vector_store %arg6[%c0_19, %c1, %c0_20, %c0_21], %50 {strides = array<i32>} : memref<1x4x8x8xbf16, #tpu.memory_space<vmem>>, vector<1x1x8x8xbf16>,
    %51 = vector.extract_strided_slice %30 {offsets = [2, 0], sizes = [1, 32], strides = [1, 1]} : vector<4x32xf32> to vector<1x32xf32>
    %52 = vector.shape_cast %51 : vector<1x32xf32> to vector<32xf32>
    %53 = vector.shape_cast %52 : vector<32xf32> to vector<1x1x32xf32>
    %54 = vector.broadcast %53 : vector<1x1x32xf32> to vector<8x8x32xf32>
    %55 = arith.mulf %29, %54 : vector<8x8x32xf32>
    %cst_22 = arith.constant dense<0.000000e+00> : vector<8x8xf32>
    %56 = vector.multi_reduction <add>, %55, %cst_22 [2] : vector<8x8x32xf32> to vector<8x8xf32>
    %57 = arith.truncf %56 : vector<8x8xf32> to vector<8x8xbf16>
    %c0_23 = arith.constant 0 : index
    %c2 = arith.constant 2 : index
    %c0_24 = arith.constant 0 : index
    %c0_25 = arith.constant 0 : index
    %58 = vector.load %arg6[%c0_23, %c2, %c0_24, %c0_25] : memref<1x4x8x8xbf16, #tpu.memory_space<vmem>>, vector<1x1x8x8xbf16>
    %59 = vector.shape_cast %58 : vector<1x1x8x8xbf16> to vector<8x8xbf16>
    %60 = vector.shape_cast %57 : vector<8x8xbf16> to vector<1x1x8x8xbf16>
    tpu.vector_store %arg6[%c0_23, %c2, %c0_24, %c0_25], %60 {strides = array<i32>} : memref<1x4x8x8xbf16, #tpu.memory_space<vmem>>, vector<1x1x8x8xbf16>,
    %61 = vector.extract_strided_slice %30 {offsets = [3, 0], sizes = [1, 32], strides = [1, 1]} : vector<4x32xf32> to vector<1x32xf32>
    %62 = vector.shape_cast %61 : vector<1x32xf32> to vector<32xf32>
    %63 = vector.shape_cast %62 : vector<32xf32> to vector<1x1x32xf32>
    %64 = vector.broadcast %63 : vector<1x1x32xf32> to vector<8x8x32xf32>
    %65 = arith.mulf %29, %64 : vector<8x8x32xf32>
    %cst_26 = arith.constant dense<0.000000e+00> : vector<8x8xf32>
    %66 = vector.multi_reduction <add>, %65, %cst_26 [2] : vector<8x8x32xf32> to vector<8x8xf32>
    %67 = arith.truncf %66 : vector<8x8xf32> to vector<8x8xbf16>
    %c0_27 = arith.constant 0 : index
    %c3 = arith.constant 3 : index
    %c0_28 = arith.constant 0 : index
    %c0_29 = arith.constant 0 : index
    %68 = vector.load %arg6[%c0_27, %c3, %c0_28, %c0_29] : memref<1x4x8x8xbf16, #tpu.memory_space<vmem>>, vector<1x1x8x8xbf16>
    %69 = vector.shape_cast %68 : vector<1x1x8x8xbf16> to vector<8x8xbf16>
    %70 = vector.shape_cast %67 : vector<8x8xbf16> to vector<1x1x8x8xbf16>
    tpu.vector_store %arg6[%c0_27, %c3, %c0_28, %c0_29], %70 {strides = array<i32>} : memref<1x4x8x8xbf16, #tpu.memory_space<vmem>>, vector<1x1x8x8xbf16>,
    return
  }
  func.func @transform_0(%arg0: i32, %arg1: i32) -> (i32, i32, i32, i32) {
    %c0_i32 = arith.constant 0 : i32
    %c0_i32_0 = arith.constant 0 : i32
    %c0_i32_1 = arith.constant 0 : i32
    return %arg0, %arg1, %c0_i32, %c0_i32_0 : i32, i32, i32, i32
  }
  func.func @transform_1(%arg0: i32, %arg1: i32) -> (i32, i32) {
    %c0_i32 = arith.constant 0 : i32
    %c0_i32_0 = arith.constant 0 : i32
    %c0_i32_1 = arith.constant 0 : i32
    return %c0_i32, %c0_i32_0 : i32, i32
  }
  func.func @transform_2(%arg0: i32, %arg1: i32) -> (i32, i32) {
    %c0_i32 = arith.constant 0 : i32
    %c0_i32_0 = arith.constant 0 : i32
    %c0_i32_1 = arith.constant 0 : i32
    return %c0_i32, %c0_i32_0 : i32, i32
  }
  func.func @transform_3(%arg0: i32, %arg1: i32) -> (i32, i32) {
    %c0_i32 = arith.constant 0 : i32
    %c0_i32_0 = arith.constant 0 : i32
    %c0_i32_1 = arith.constant 0 : i32
    return %c0_i32, %c0_i32_0 : i32, i32
  }
  func.func @transform_4(%arg0: i32, %arg1: i32) -> (i32, i32, i32, i32) {
    %c0_i32 = arith.constant 0 : i32
    %c0_i32_0 = arith.constant 0 : i32
    %c0_i32_1 = arith.constant 0 : i32
    return %arg0, %c0_i32, %arg1, %c0_i32_0 : i32, i32, i32, i32
  }
}

</mosaic_0001>

<llo_original>
// kernel: tpu_custom_call.1
$region0: #{tpu_custom_call.1}
  #allocation0 [shape = 'u32[]', space=smem, size = 0x4, offset = 0x4, fixed_abs, tag = 'smem constant byte address 0x4 - core index']
  #allocation1 [shape = 'u32[144,128]{1,0:T(1,128)}', space=vmem, size = 0x12000, scoped, tag = 'internal scratch']
  %s0 = inlined_call_operand.hbm [shape: f32[2,8,8,32], index: 0, kind: input, shape index: {}]
  %s1 = inlined_call_operand.vmem [shape: f32[1,32], index: 1, kind: input, shape index: {}]
  %s2 = inlined_call_operand.vmem [shape: f32[1,32], index: 2, kind: input, shape index: {}]
  %s3 = inlined_call_operand.vmem [shape: f32[4,32], index: 3, kind: input, shape index: {}]
  %s4 = inlined_call_operand.hbm [shape: bf16[2,4,8,8], index: 4, kind: output, shape index: {}]
  %s5 = sld [smem:[#allocation0]]
  $region53: #{tpu_custom_call.1} parent=0
    _
  %s7 = ssub.s32 1, %s5
  %s8 = scalar_select 0, %s7, %s5
  $region1: #{tpu_custom_call.1} parent=0
    #allocation2 [shape = 'u8[65536]{0}', space=vmem, size = 0x10000, scoped, tag = 'input window, operand 0']
    #allocation3 [shape = 's32[2]{0}', space=sflag, size = 0x8, scoped, tag = 'scoped memory for tpu_custom_call.1']
    #allocation4 [shape = 's32[2]{0}', space=sflag, size = 0x8, scoped, tag = 'scoped memory for tpu_custom_call.1']
    #allocation5 [shape = 'u8[16384]{0}', space=vmem, size = 0x4000, scoped, tag = 'output window, operand 0']
    %9 = vsyncpa [#allocation3], 0
    %s10 = scalar_lea.sflag [#allocation3], 1
    %11 = vsyncpa %s10, 0
    %12 = vsyncpa [#allocation4], 0
    %s13 = scalar_lea.sflag [#allocation4], 1
    %14 = vsyncpa %s13, 0
    loop: start=0, step=1, limit=4
    $region2: #{tpu_custom_call.1} parent=1 // loop_pre_header
      _
    $region3: #{tpu_custom_call.1} parent=1 // loop_header
      %s16 = sphi 0, %s20
      %p17 = scmp.ge.s32.totalorder %s16, 4
      %s23 = sphi 0, %s35
      %s24 = sphi 0, %s31
      %s25 = sphi 0, %s23
      %s26 = sphi 0, %s24
      %s27 = sphi 0, %s25
      %s28 = sphi 0, %s26
      %s40 = sphi 0, %s42
      %s43 = sphi 0, %s40
      %s44 = sphi 0, %s43
      %s60 = sphi 0, %s44
      %s64 = sphi 0, %s64
      %s66 = sphi 0, %s64
      %s67 = sphi 0, %s66
      %s81 = sphi 0, %s67
      %s85 = sphi 0, %s85
      %s87 = sphi 0, %s85
      %s88 = sphi 0, %s87
      %s102 = sphi 0, %s88
      %s106 = sphi 0, %s106
      %s108 = sphi 0, %s106
      %s109 = sphi 0, %s108
      %s123 = sphi 0, %s109
      %s131 = sphi 0, %s133
      %s134 = sphi 0, %s131
      %s135 = sphi 0, %s134
      %s151 = sphi 0, %s135
    $region4: #{tpu_custom_call.1} parent=1 // loop_header_branch
      %19 = sbr.rel (%p17) target = $region8
    $region5: #{tpu_custom_call.1} parent=1 // loop_body
      %s21 = ssub.s32 %s16, 1
      %s22 = ssub.s32 %s16, 2
      %s29 = sadd.s32 1, %s24
      %p30 = scmp.ge.s32.totalorder %s29, 1
      %s31 = scalar_select %p30, 0, %s29
      %s32 = sadd.s32 1, %s23
      %s33 = scalar_select %p30, %s32, %s23
      %p34 = scmp.ge.s32.totalorder %s33, 2
      %s35 = scalar_select %p34, 0, %s33
      %s36 = ssub.s32 %s23, %s35
      %s37 = ssub.s32 %s24, %s31
      %s38 = sor.u32 %s36, %s37
      %p39 = scmp.eq.s32.totalorder %s38, 0
      %s41 = sadd.s32 %s40, 1
      %s42 = scalar_select %p39, %s40, %s41
      %p45 = pneg %p39
      %p46 = scmp.eq.s32.totalorder %s16, 1
      %p47 = por %p45, %p46
      %p48 = scmp.ne.s32.totalorder %s40, %s43
      %p49 = scmp.eq.s32.totalorder %s16, 0
      %p50 = por %p48, %p49
      %p51 = scmp.ne.s32.totalorder %s40, %s43
      %p52 = scmp.eq.s32.totalorder %s21, 1
      %p53 = por %p51, %p52
      %p54 = scmp.ne.s32.totalorder %s43, %s44
      %p55 = scmp.eq.s32.totalorder %s21, 0
      %p56 = por %p54, %p55
      %p57 = scmp.ne.s32.totalorder %s43, %s44
      %p58 = scmp.eq.s32.totalorder %s22, 1
      %p59 = por %p57, %p58
      %p61 = scmp.ne.s32.totalorder %s44, %s60
      %p62 = scmp.eq.s32.totalorder %s22, 0
      %p63 = por %p61, %p62
      %s65 = sadd.s32 %s64, 1
      %p68 = scmp.eq.s32.totalorder %s16, 1
      %p69 = scmp.ne.s32.totalorder %s64, %s66
      %p70 = scmp.eq.s32.totalorder %s16, 0
      %p71 = por %p69, %p70
      %p72 = scmp.ne.s32.totalorder %s64, %s66
      %p73 = scmp.eq.s32.totalorder %s21, 1
      %p74 = por %p72, %p73
      %p75 = scmp.ne.s32.totalorder %s66, %s67
      %p76 = scmp.eq.s32.totalorder %s21, 0
      %p77 = por %p75, %p76
      %p78 = scmp.ne.s32.totalorder %s66, %s67
      %p79 = scmp.eq.s32.totalorder %s22, 1
      %p80 = por %p78, %p79
      %p82 = scmp.ne.s32.totalorder %s67, %s81
      %p83 = scmp.eq.s32.totalorder %s22, 0
      %p84 = por %p82, %p83
      %s86 = sadd.s32 %s85, 1
      %p89 = scmp.eq.s32.totalorder %s16, 1
      %p90 = scmp.ne.s32.totalorder %s85, %s87
      %p91 = scmp.eq.s32.totalorder %s16, 0
      %p92 = por %p90, %p91
      %p93 = scmp.ne.s32.totalorder %s85, %s87
      %p94 = scmp.eq.s32.totalorder %s21, 1
      %p95 = por %p93, %p94
      %p96 = scmp.ne.s32.totalorder %s87, %s88
      %p97 = scmp.eq.s32.totalorder %s21, 0
      %p98 = por %p96, %p97
      %p99 = scmp.ne.s32.totalorder %s87, %s88
      %p100 = scmp.eq.s32.totalorder %s22, 1
      %p101 = por %p99, %p100
      %p103 = scmp.ne.s32.totalorder %s88, %s102
      %p104 = scmp.eq.s32.totalorder %s22, 0
      %p105 = por %p103, %p104
      %s107 = sadd.s32 %s106, 1
      %p110 = scmp.eq.s32.totalorder %s16, 1
      %p111 = scmp.ne.s32.totalorder %s106, %s108
      %p112 = scmp.eq.s32.totalorder %s16, 0
      %p113 = por %p111, %p112
      %p114 = scmp.ne.s32.totalorder %s106, %s108
      %p115 = scmp.eq.s32.totalorder %s21, 1
      %p116 = por %p114, %p115
      %p117 = scmp.ne.s32.totalorder %s108, %s109
      %p118 = scmp.eq.s32.totalorder %s21, 0
      %p119 = por %p117, %p118
      %p120 = scmp.ne.s32.totalorder %s108, %s109
      %p121 = scmp.eq.s32.totalorder %s22, 1
      %p122 = por %p120, %p121
      %p124 = scmp.ne.s32.totalorder %s109, %s123
      %p125 = scmp.eq.s32.totalorder %s22, 0
      %p126 = por %p124, %p125
      %s127 = ssub.s32 %s23, %s35
      %s128 = ssub.s32 %s24, %s31
      %s129 = sor.u32 %s127, %s128
      %p130 = scmp.eq.s32.totalorder %s129, 0
      %s132 = sadd.s32 %s131, 1
      %s133 = scalar_select %p130, %s131, %s132
      %p136 = pneg %p130
      %p137 = scmp.eq.s32.totalorder %s16, 1
      %p138 = por %p136, %p137
      %p139 = scmp.ne.s32.totalorder %s131, %s134
      %p140 = scmp.eq.s32.totalorder %s16, 0
      %p141 = por %p139, %p140
      %p142 = scmp.ne.s32.totalorder %s131, %s134
      %p143 = scmp.eq.s32.totalorder %s21, 1
      %p144 = por %p142, %p143
      %p145 = scmp.ne.s32.totalorder %s134, %s135
      %p146 = scmp.eq.s32.totalorder %s21, 0
      %p147 = por %p145, %p146
      %p148 = scmp.ne.s32.totalorder %s134, %s135
      %p149 = scmp.eq.s32.totalorder %s22, 1
      %p150 = por %p148, %p149
      %p152 = scmp.ne.s32.totalorder %s135, %s151
      %p153 = scmp.eq.s32.totalorder %s22, 0
      %p154 = por %p152, %p153
      %p155 = scmp.le.s32.totalorder 1, %s16
      %p156 = scmp.lt.s32.totalorder %s16, 3
      %p157 = pnand %p155, %p156
      %p158 = pneg %p157
      // Predicated region
      $region9: #{tpu_custom_call.1} parent=5 // pred_check
        _
      $region10: #{tpu_custom_call.1} parent=5 // pred_check_branch
        %160 = sbr.rel (%p157) target = $region12
      $region11: #{tpu_custom_call.1} parent=5 // pred_region
        %s161 = ssub.s32 %s16, 1
        // Predicated region
        $region13: #{tpu_custom_call.1} parent=11 // pred_check
          %p162 = pneg %p77
        $region14: #{tpu_custom_call.1} parent=11 // pred_check_branch
          %164 = sbr.rel (%p162) target = $region16
        $region15: #{tpu_custom_call.1} parent=11 // pred_region
          _
        $region16: #{tpu_custom_call.1} parent=11 // pred_fallthru
          _
        // Predicated region
        $region17: #{tpu_custom_call.1} parent=11 // pred_check
          %p165 = pneg %p98
        $region18: #{tpu_custom_call.1} parent=11 // pred_check_branch
          %167 = sbr.rel (%p165) target = $region20
        $region19: #{tpu_custom_call.1} parent=11 // pred_region
          _
        $region20: #{tpu_custom_call.1} parent=11 // pred_fallthru
          _
        // Predicated region
        $region21: #{tpu_custom_call.1} parent=11 // pred_check
          %p168 = pneg %p119
        $region22: #{tpu_custom_call.1} parent=11 // pred_check_branch
          %170 = sbr.rel (%p168) target = $region24
        $region23: #{tpu_custom_call.1} parent=11 // pred_region
          _
        $region24: #{tpu_custom_call.1} parent=11 // pred_fallthru
          _
      $region12: #{tpu_custom_call.1} parent=5 // pred_fallthru
        _
      %p171 = scmp.lt.s32.totalorder %s16, 2
      // Predicated region
      $region25: #{tpu_custom_call.1} parent=5 // pred_check
        %p172 = pneg %p171
      $region26: #{tpu_custom_call.1} parent=5 // pred_check_branch
        %174 = sbr.rel (%p172) target = $region28
      $region27: #{tpu_custom_call.1} parent=5 // pred_region
        // Predicated region
        $region29: #{tpu_custom_call.1} parent=27 // pred_check
          %p175 = pneg %p50
        $region30: #{tpu_custom_call.1} parent=27 // pred_check_branch
          %177 = sbr.rel (%p175) target = $region32
        $region31: #{tpu_custom_call.1} parent=27 // pred_region
          %s178 = sand.u32 %s40, 1
          %s179 = scalar_lea.sflag [#allocation3], %s178
          %s180 = sand.u32 %s40, 1
          %s181 = smul.addr %s180, 64
          %s182 = scalar_lea.vmem [#allocation2], %s181
          %s183 = smul.u32 8, %s24
          %s185 = ssub.s32 1024, 1024
          %186 = vsyncadd %s179, %s185
          %s187 = smul.addr %s23, 8
          %s188 = sadd.s32 %s183, %s187
          %s189 = smul.addr %s188, 128
          %s190 = scalar_lea.hbm %s0, %s189
          %s191 = sshll.u32 %s182, 4
          %s192 = int_to_ptr.vmem [resolvable:$true] %s191
          %197 = dma.hbm_to_vmem [thread:$0]  %s190, 1024, %s192, %s179, 128, 128, 8
        $region32: #{tpu_custom_call.1} parent=27 // pred_fallthru
          _
      $region28: #{tpu_custom_call.1} parent=5 // pred_fallthru
        _
      %p198 = scmp.le.s32.totalorder 1, %s16
      %p199 = scmp.lt.s32.totalorder %s16, 3
      %p200 = pnand %p198, %p199
      %p201 = pneg %p200
      // Predicated region
      $region33: #{tpu_custom_call.1} parent=5 // pred_check
        _
      $region34: #{tpu_custom_call.1} parent=5 // pred_check_branch
        %203 = sbr.rel (%p200) target = $region36
      $region35: #{tpu_custom_call.1} parent=5 // pred_region
        %s204 = ssub.s32 %s16, 1
        %s205 = sand.u32 %s43, 1
        %s206 = scalar_lea.sflag [#allocation3], %s205
        %s207 = sand.u32 %s43, 1
        %s208 = smul.addr %s207, 64
        %s209 = scalar_lea.vmem [#allocation2], %s208
        // Predicated region
        $region37: #{tpu_custom_call.1} parent=35 // pred_check
          %p210 = pneg %p56
        $region38: #{tpu_custom_call.1} parent=35 // pred_check_branch
          %212 = sbr.rel (%p210) target = $region40
        $region39: #{tpu_custom_call.1} parent=35 // pred_region
          %213 = dma.done %s206, 1024
        $region40: #{tpu_custom_call.1} parent=35 // pred_fallthru
          _
        %s214 = sand.u32 %s43, 1
        %s215 = scalar_lea.sflag [#allocation3], %s214
        %s216 = sand.u32 %s43, 1
        %s217 = smul.addr %s216, 64
        %s218 = scalar_lea.vmem [#allocation2], %s217
        %p219 = pneg %p56
        %p220 = pneg %p53
        %p221 = pneg %p77
        %p222 = pneg %p74
        %p223 = pneg %p98
        %p224 = pneg %p95
        %p225 = pneg %p119
        %p226 = pneg %p116
        %p227 = pneg %p147
        %p228 = pneg %p144
        %s229 = sand.u32 %s134, 1
        %s230 = scalar_lea.sflag [#allocation4], %s229
        %s231 = sand.u32 %s134, 1
        %s232 = smul.addr %s231, 16
        %s233 = scalar_lea.vmem [#allocation5], %s232
        %s234 = smul.u32 8, %s26
        %v235 = vld [vmem:[%s209] sm:$0xff]
        %v236 = vld [vmem:[%s209 + $0x8] sm:$0xff]
        %v237 = vld [vmem:[%s209 + $0x10] sm:$0xff]
        %v238 = vld [vmem:[%s209 + $0x18] sm:$0xff]
        %v239 = vld [vmem:[%s209 + $0x20] sm:$0xff]
        %v240 = vld [vmem:[%s209 + $0x28] sm:$0xff]
        %v241 = vld [vmem:[%s209 + $0x30] sm:$0xff]
        %v242 = vld [vmem:[%s209 + $0x38] sm:$0xff]
        %v243 = vld [vmem:[%s1] sm:$0x1]
        %v244 = vld [vmem:[%s2] sm:$0x1]
        %vm245 = vcmask 261120
        %v246 = vsel %vm245, %v235, 0.0
        %247 = vadd.xlane.f32.xlu0 %v246
        %v248 = vpop.xlane.xlu0 %247
        %v249 = vsel %vm245, %v236, 0.0
        %250 = vadd.xlane.f32.xlu0 %v249
        %v251 = vpop.xlane.xlu0 %250
        %v252 = vsel %vm245, %v237, 0.0
        %253 = vadd.xlane.f32.xlu0 %v252
        %v254 = vpop.xlane.xlu0 %253
        %v255 = vsel %vm245, %v238, 0.0
        %256 = vadd.xlane.f32.xlu0 %v255
        %v257 = vpop.xlane.xlu0 %256
        %v258 = vsel %vm245, %v239, 0.0
        %259 = vadd.xlane.f32.xlu0 %v258
        %v260 = vpop.xlane.xlu0 %259
        %v261 = vsel %vm245, %v240, 0.0
        %262 = vadd.xlane.f32.xlu0 %v261
        %v263 = vpop.xlane.xlu0 %262
        %v264 = vsel %vm245, %v241, 0.0
        %265 = vadd.xlane.f32.xlu0 %v264
        %v266 = vpop.xlane.xlu0 %265
        %v267 = vsel %vm245, %v242, 0.0
        %268 = vadd.xlane.f32.xlu0 %v267
        %v269 = vpop.xlane.xlu0 %268
        %v270 = vrcp.pop 32.0
        %v271 = vmul.f32 %v248, %v270
        %v272 = vmul.f32 %v251, %v270
        %v273 = vmul.f32 %v254, %v270
        %v274 = vmul.f32 %v257, %v270
        %v275 = vmul.f32 %v260, %v270
        %v276 = vmul.f32 %v263, %v270
        %v277 = vmul.f32 %v266, %v270
        %v278 = vmul.f32 %v269, %v270
        %v279 = vsub.f32 %v235, %v271
        %v280 = vsub.f32 %v236, %v272
        %v281 = vsub.f32 %v237, %v273
        %v282 = vsub.f32 %v238, %v274
        %v283 = vsub.f32 %v239, %v275
        %v284 = vsub.f32 %v240, %v276
        %v285 = vsub.f32 %v241, %v277
        %v286 = vsub.f32 %v242, %v278
        %v287 = vmul.f32 %v279, %v279
        %v288 = vmul.f32 %v280, %v280
        %v289 = vmul.f32 %v281, %v281
        %v290 = vmul.f32 %v282, %v282
        %v291 = vmul.f32 %v283, %v283
        %v292 = vmul.f32 %v284, %v284
        %v293 = vmul.f32 %v285, %v285
        %v294 = vmul.f32 %v286, %v286
        %v295 = vsel %vm245, %v287, 0.0
        %296 = vadd.xlane.f32.xlu0 %v295
        %v297 = vpop.xlane.xlu0 %296
        %v298 = vsel %vm245, %v288, 0.0
        %299 = vadd.xlane.f32.xlu0 %v298
        %v300 = vpop.xlane.xlu0 %299
        %v301 = vsel %vm245, %v289, 0.0
        %302 = vadd.xlane.f32.xlu0 %v301
        %v303 = vpop.xlane.xlu0 %302
        %v304 = vsel %vm245, %v290, 0.0
        %305 = vadd.xlane.f32.xlu0 %v304
        %v306 = vpop.xlane.xlu0 %305
        %v307 = vsel %vm245, %v291, 0.0
        %308 = vadd.xlane.f32.xlu0 %v307
        %v309 = vpop.xlane.xlu0 %308
        %v310 = vsel %vm245, %v292, 0.0
        %311 = vadd.xlane.f32.xlu0 %v310
        %v312 = vpop.xlane.xlu0 %311
        %v313 = vsel %vm245, %v293, 0.0
        %314 = vadd.xlane.f32.xlu0 %v313
        %v315 = vpop.xlane.xlu0 %314
        %v316 = vsel %vm245, %v294, 0.0
        %317 = vadd.xlane.f32.xlu0 %v316
        %v318 = vpop.xlane.xlu0 %317
        %v319 = vmul.f32 %v297, %v270
        %v320 = vmul.f32 %v300, %v270
        %v321 = vmul.f32 %v303, %v270
        %v322 = vmul.f32 %v306, %v270
        %v323 = vmul.f32 %v309, %v270
        %v324 = vmul.f32 %v312, %v270
        %v325 = vmul.f32 %v315, %v270
        %v326 = vmul.f32 %v318, %v270
        %v327 = vadd.f32 %v319, 1e-05
        %v328 = vadd.f32 %v320, 1e-05
        %v329 = vadd.f32 %v321, 1e-05
        %v330 = vadd.f32 %v322, 1e-05
        %v331 = vadd.f32 %v323, 1e-05
        %v332 = vadd.f32 %v324, 1e-05
        %v333 = vadd.f32 %v325, 1e-05
        %v334 = vadd.f32 %v326, 1e-05
        %v335 = vrsqrt.pop %v327
        %v336 = vrsqrt.pop %v328
        %v337 = vrsqrt.pop %v329
        %v338 = vrsqrt.pop %v330
        %v339 = vrsqrt.pop %v331
        %v340 = vrsqrt.pop %v332
        %v341 = vrsqrt.pop %v333
        %v342 = vrsqrt.pop %v334
        %v343 = vmul.f32 %v279, %v335
        %v344 = vmul.f32 %v280, %v336
        %v345 = vmul.f32 %v281, %v337
        %v346 = vmul.f32 %v282, %v338
        %v347 = vmul.f32 %v283, %v339
        %v348 = vmul.f32 %v284, %v340
        %v349 = vmul.f32 %v285, %v341
        %v350 = vmul.f32 %v286, %v342
        %v352 = vlaneseq
        %v353 = vshrl.u32 %v352, 7
        %v354 = vsub.s32 0, %v353
        %v355 = vrot.slane %v243, %v354
        %v357 = vmul.f32 %v343, %v355
        %v358 = vmul.f32 %v344, %v355
        %v359 = vmul.f32 %v345, %v355
        %v360 = vmul.f32 %v346, %v355
        %v361 = vmul.f32 %v347, %v355
        %v362 = vmul.f32 %v348, %v355
        %v363 = vmul.f32 %v349, %v355
        %v364 = vmul.f32 %v350, %v355
        %v366 = vlaneseq
        %v367 = vshrl.u32 %v366, 7
        %v368 = vsub.s32 0, %v367
        %v369 = vrot.slane %v244, %v368
        %v371 = vadd.f32 %v357, %v369
        %v372 = vadd.f32 %v358, %v369
        %v373 = vadd.f32 %v359, %v369
        %v374 = vadd.f32 %v360, %v369
        %v375 = vadd.f32 %v361, %v369
        %v376 = vadd.f32 %v362, %v369
        %v377 = vadd.f32 %v363, %v369
        %v378 = vadd.f32 %v364, %v369
        %v379 = vld [vmem:[%s3] sm:$0xf]
        %v380 = vlaneseq
        %v381 = vshrl.u32 %v380, 7
        %v382 = vsub.s32 0, %v381
        %v383 = vrot.slane %v379, %v382
        %v384 = vmul.f32 %v371, %v383
        %v385 = vmul.f32 %v372, %v383
        %v386 = vmul.f32 %v373, %v383
        %v387 = vmul.f32 %v374, %v383
        %v388 = vmul.f32 %v375, %v383
        %v389 = vmul.f32 %v376, %v383
        %v390 = vmul.f32 %v377, %v383
        %v391 = vmul.f32 %v378, %v383
        %v392 = vsel %vm245, %v384, 0.0
        %393 = vadd.xlane.f32.xlu0 %v392
        %v394 = vpop.xlane.xlu0 %393
        %v395 = vsel %vm245, %v385, 0.0
        %396 = vadd.xlane.f32.xlu0 %v395
        %v397 = vpop.xlane.xlu0 %396
        %v398 = vsel %vm245, %v386, 0.0
        %399 = vadd.xlane.f32.xlu0 %v398
        %v400 = vpop.xlane.xlu0 %399
        %v401 = vsel %vm245, %v387, 0.0
        %402 = vadd.xlane.f32.xlu0 %v401
        %v403 = vpop.xlane.xlu0 %402
        %v404 = vsel %vm245, %v388, 0.0
        %405 = vadd.xlane.f32.xlu0 %v404
        %v406 = vpop.xlane.xlu0 %405
        %v407 = vsel %vm245, %v389, 0.0
        %408 = vadd.xlane.f32.xlu0 %v407
        %v409 = vpop.xlane.xlu0 %408
        %v410 = vsel %vm245, %v390, 0.0
        %411 = vadd.xlane.f32.xlu0 %v410
        %v412 = vpop.xlane.xlu0 %411
        %v413 = vsel %vm245, %v391, 0.0
        %414 = vadd.xlane.f32.xlu0 %v413
        %v415 = vpop.xlane.xlu0 %414
        %v416 = vpack.c.bf16 %v394, %v394
        %v417 = vpack.c.bf16 %v397, %v397
        %v418 = vpack.c.bf16 %v400, %v400
        %v419 = vpack.c.bf16 %v403, %v403
        %v420 = vpack.c.bf16 %v406, %v406
        %v421 = vpack.c.bf16 %v409, %v409
        %v422 = vpack.c.bf16 %v412, %v412
        %v423 = vpack.c.bf16 %v415, %v415
        %v433 = vunpack.c.l.s4 839922192
        %v434 = vunpack.c.0.s8 %v433
        %v435 = vlaneseq
        %v436 = vshrl.u32 %v435, 7
        %v437 = vsub.s32 %v434, %v436
        %v438 = vrot.slane %v416, %v437
        %v440 = vunpack.c.l.s4 839922192
        %v441 = vunpack.c.0.s8 %v440
        %v442 = vlaneseq
        %v443 = vshrl.u32 %v442, 7
        %v444 = vsub.s32 %v441, %v443
        %v445 = vrot.slane %v417, %v444
        %v447 = vunpack.c.l.s4 839922192
        %v448 = vunpack.c.0.s8 %v447
        %v449 = vlaneseq
        %v450 = vshrl.u32 %v449, 7
        %v451 = vsub.s32 %v448, %v450
        %v452 = vrot.slane %v418, %v451
        %v454 = vunpack.c.l.s4 839922192
        %v455 = vunpack.c.0.s8 %v454
        %v456 = vlaneseq
        %v457 = vshrl.u32 %v456, 7
        %v458 = vsub.s32 %v455, %v457
        %v459 = vrot.slane %v419, %v458
        %v461 = vunpack.c.l.s4 839922192
        %v462 = vunpack.c.0.s8 %v461
        %v463 = vlaneseq
        %v464 = vshrl.u32 %v463, 7
        %v465 = vsub.s32 %v462, %v464
        %v466 = vrot.slane %v420, %v465
        %v468 = vunpack.c.l.s4 839922192
        %v469 = vunpack.c.0.s8 %v468
        %v470 = vlaneseq
        %v471 = vshrl.u32 %v470, 7
        %v472 = vsub.s32 %v469, %v471
        %v473 = vrot.slane %v421, %v472
        %v475 = vunpack.c.l.s4 839922192
        %v476 = vunpack.c.0.s8 %v475
        %v477 = vlaneseq
        %v478 = vshrl.u32 %v477, 7
        %v479 = vsub.s32 %v476, %v478
        %v480 = vrot.slane %v422, %v479
        %v482 = vunpack.c.l.s4 839922192
        %v483 = vunpack.c.0.s8 %v482
        %v484 = vlaneseq
        %v485 = vshrl.u32 %v484, 7
        %v486 = vsub.s32 %v483, %v485
        %v487 = vrot.slane %v423, %v486
        %v488 = vunpack.c.l.b16 %v438
        %v489 = vunpack.c.l.b16 %v445
        %v490 = vunpack.c.l.b16 %v452
        %v491 = vunpack.c.l.b16 %v459
        %v492 = vunpack.c.l.b16 %v466
        %v493 = vunpack.c.l.b16 %v473
        %v494 = vunpack.c.l.b16 %v480
        %v495 = vunpack.c.l.b16 %v487
        %v496 = vlaneseq
        %v497 = vand.u32 %v496, 127
        %v498 = vlaneseq
        %v499 = vshrl.u32 %v498, 7
        %v500 = vsub.s32 %v497, %v499
        %v501 = vrot.slane %v488, %v500
        %v502 = vlaneseq
        %v503 = vshrl.u32 %v502, 7
        %v504 = vsub.s32 %v497, %v503
        %v505 = vrot.slane %v489, %v504
        %v506 = vlaneseq
        %v507 = vshrl.u32 %v506, 7
        %v508 = vsub.s32 %v497, %v507
        %v509 = vrot.slane %v490, %v508
        %v510 = vlaneseq
        %v511 = vshrl.u32 %v510, 7
        %v512 = vsub.s32 %v497, %v511
        %v513 = vrot.slane %v491, %v512
        %v514 = vlaneseq
        %v515 = vshrl.u32 %v514, 7
        %v516 = vsub.s32 %v497, %v515
        %v517 = vrot.slane %v492, %v516
        %v518 = vlaneseq
        %v519 = vshrl.u32 %v518, 7
        %v520 = vsub.s32 %v497, %v519
        %v521 = vrot.slane %v493, %v520
        %v522 = vlaneseq
        %v523 = vshrl.u32 %v522, 7
        %v524 = vsub.s32 %v497, %v523
        %v525 = vrot.slane %v494, %v524
        %v526 = vlaneseq
        %v527 = vshrl.u32 %v526, 7
        %v528 = vsub.s32 %v497, %v527
        %v529 = vrot.slane %v495, %v528
        %vm530 = vcmask 1041409
        %v531 = vsel %vm530, %v505, %v501
        %vm532 = vcmask 1042434
        %v533 = vsel %vm532, %v509, %v531
        %vm534 = vcmask 1043459
        %v535 = vsel %vm534, %v513, %v533
        %vm536 = vcmask 1044484
        %v537 = vsel %vm536, %v517, %v535
        %vm538 = vcmask 1045509
        %v539 = vsel %vm538, %v521, %v537
        %vm540 = vcmask 1046534
        %v541 = vsel %vm540, %v525, %v539
        %vm542 = vcmask 1047559
        %v543 = vsel %vm542, %v529, %v541
        %v544 = vpack.c.b16 %v543, %v543
        %vm546 = vcmask 60416
        %547 = vst.msk [vmem:[%s233] sm:$0xf] %vm546, %v544
        %v548 = vlaneseq
        %v549 = vshrl.u32 %v548, 7
        %v550 = vsub.s32 1, %v549
        %v551 = vrot.slane %v379, %v550
        %v552 = vmul.f32 %v371, %v551
        %v553 = vmul.f32 %v372, %v551
        %v554 = vmul.f32 %v373, %v551
        %v555 = vmul.f32 %v374, %v551
        %v556 = vmul.f32 %v375, %v551
        %v557 = vmul.f32 %v376, %v551
        %v558 = vmul.f32 %v377, %v551
        %v559 = vmul.f32 %v378, %v551
        %v560 = vsel %vm245, %v552, 0.0
        %561 = vadd.xlane.f32.xlu0 %v560
        %v562 = vpop.xlane.xlu0 %561
        %v563 = vsel %vm245, %v553, 0.0
        %564 = vadd.xlane.f32.xlu0 %v563
        %v565 = vpop.xlane.xlu0 %564
        %v566 = vsel %vm245, %v554, 0.0
        %567 = vadd.xlane.f32.xlu0 %v566
        %v568 = vpop.xlane.xlu0 %567
        %v569 = vsel %vm245, %v555, 0.0
        %570 = vadd.xlane.f32.xlu0 %v569
        %v571 = vpop.xlane.xlu0 %570
        %v572 = vsel %vm245, %v556, 0.0
        %573 = vadd.xlane.f32.xlu0 %v572
        %v574 = vpop.xlane.xlu0 %573
        %v575 = vsel %vm245, %v557, 0.0
        %576 = vadd.xlane.f32.xlu0 %v575
        %v577 = vpop.xlane.xlu0 %576
        %v578 = vsel %vm245, %v558, 0.0
        %579 = vadd.xlane.f32.xlu0 %v578
        %v580 = vpop.xlane.xlu0 %579
        %v581 = vsel %vm245, %v559, 0.0
        %582 = vadd.xlane.f32.xlu0 %v581
        %v583 = vpop.xlane.xlu0 %582
        %v584 = vpack.c.bf16 %v562, %v562
        %v585 = vpack.c.bf16 %v565, %v565
        %v586 = vpack.c.bf16 %v568, %v568
        %v587 = vpack.c.bf16 %v571, %v571
        %v588 = vpack.c.bf16 %v574, %v574
        %v589 = vpack.c.bf16 %v577, %v577
        %v590 = vpack.c.bf16 %v580, %v580
        %v591 = vpack.c.bf16 %v583, %v583
        %v601 = vunpack.c.l.s4 839922192
        %v602 = vunpack.c.0.s8 %v601
        %v603 = vlaneseq
        %v604 = vshrl.u32 %v603, 7
        %v605 = vsub.s32 %v602, %v604
        %v606 = vrot.slane %v584, %v605
        %v608 = vunpack.c.l.s4 839922192
        %v609 = vunpack.c.0.s8 %v608
        %v610 = vlaneseq
        %v611 = vshrl.u32 %v610, 7
        %v612 = vsub.s32 %v609, %v611
        %v613 = vrot.slane %v585, %v612
        %v615 = vunpack.c.l.s4 839922192
        %v616 = vunpack.c.0.s8 %v615
        %v617 = vlaneseq
        %v618 = vshrl.u32 %v617, 7
        %v619 = vsub.s32 %v616, %v618
        %v620 = vrot.slane %v586, %v619
        %v622 = vunpack.c.l.s4 839922192
        %v623 = vunpack.c.0.s8 %v622
        %v624 = vlaneseq
        %v625 = vshrl.u32 %v624, 7
        %v626 = vsub.s32 %v623, %v625
        %v627 = vrot.slane %v587, %v626
        %v629 = vunpack.c.l.s4 839922192
        %v630 = vunpack.c.0.s8 %v629
        %v631 = vlaneseq
        %v632 = vshrl.u32 %v631, 7
        %v633 = vsub.s32 %v630, %v632
        %v634 = vrot.slane %v588, %v633
        %v636 = vunpack.c.l.s4 839922192
        %v637 = vunpack.c.0.s8 %v636
        %v638 = vlaneseq
        %v639 = vshrl.u32 %v638, 7
        %v640 = vsub.s32 %v637, %v639
        %v641 = vrot.slane %v589, %v640
        %v643 = vunpack.c.l.s4 839922192
        %v644 = vunpack.c.0.s8 %v643
        %v645 = vlaneseq
        %v646 = vshrl.u32 %v645, 7
        %v647 = vsub.s32 %v644, %v646
        %v648 = vrot.slane %v590, %v647
        %v650 = vunpack.c.l.s4 839922192
        %v651 = vunpack.c.0.s8 %v650
        %v652 = vlaneseq
        %v653 = vshrl.u32 %v652, 7
        %v654 = vsub.s32 %v651, %v653
        %v655 = vrot.slane %v591, %v654
        %v656 = vunpack.c.l.b16 %v606
        %v657 = vunpack.c.l.b16 %v613
        %v658 = vunpack.c.l.b16 %v620
        %v659 = vunpack.c.l.b16 %v627
        %v660 = vunpack.c.l.b16 %v634
        %v661 = vunpack.c.l.b16 %v641
        %v662 = vunpack.c.l.b16 %v648
        %v663 = vunpack.c.l.b16 %v655
        %v664 = vlaneseq
        %v665 = vshrl.u32 %v664, 7
        %v666 = vsub.s32 %v497, %v665
        %v667 = vrot.slane %v656, %v666
        %v668 = vlaneseq
        %v669 = vshrl.u32 %v668, 7
        %v670 = vsub.s32 %v497, %v669
        %v671 = vrot.slane %v657, %v670
        %v672 = vlaneseq
        %v673 = vshrl.u32 %v672, 7
        %v674 = vsub.s32 %v497, %v673
        %v675 = vrot.slane %v658, %v674
        %v676 = vlaneseq
        %v677 = vshrl.u32 %v676, 7
        %v678 = vsub.s32 %v497, %v677
        %v679 = vrot.slane %v659, %v678
        %v680 = vlaneseq
        %v681 = vshrl.u32 %v680, 7
        %v682 = vsub.s32 %v497, %v681
        %v683 = vrot.slane %v660, %v682
        %v684 = vlaneseq
        %v685 = vshrl.u32 %v684, 7
        %v686 = vsub.s32 %v497, %v685
        %v687 = vrot.slane %v661, %v686
        %v688 = vlaneseq
        %v689 = vshrl.u32 %v688, 7
        %v690 = vsub.s32 %v497, %v689
        %v691 = vrot.slane %v662, %v690
        %v692 = vlaneseq
        %v693 = vshrl.u32 %v692, 7
        %v694 = vsub.s32 %v497, %v693
        %v695 = vrot.slane %v663, %v694
        %v696 = vsel %vm530, %v671, %v667
        %v697 = vsel %vm532, %v675, %v696
        %v698 = vsel %vm534, %v679, %v697
        %v699 = vsel %vm536, %v683, %v698
        %v700 = vsel %vm538, %v687, %v699
        %v701 = vsel %vm540, %v691, %v700
        %v702 = vsel %vm542, %v695, %v701
        %v703 = vpack.c.b16 %v702, %v702
        %s705 = scalar_lea.vmem %s233, 4 [#allocation5]
        %706 = vst.msk [vmem:[%s705] sm:$0xf] %vm546, %v703
        %v707 = vlaneseq
        %v708 = vshrl.u32 %v707, 7
        %v709 = vsub.s32 2, %v708
        %v710 = vrot.slane %v379, %v709
        %v711 = vmul.f32 %v371, %v710
        %v712 = vmul.f32 %v372, %v710
        %v713 = vmul.f32 %v373, %v710
        %v714 = vmul.f32 %v374, %v710
        %v715 = vmul.f32 %v375, %v710
        %v716 = vmul.f32 %v376, %v710
        %v717 = vmul.f32 %v377, %v710
        %v718 = vmul.f32 %v378, %v710
        %v719 = vsel %vm245, %v711, 0.0
        %720 = vadd.xlane.f32.xlu0 %v719
        %v721 = vpop.xlane.xlu0 %720
        %v722 = vsel %vm245, %v712, 0.0
        %723 = vadd.xlane.f32.xlu0 %v722
        %v724 = vpop.xlane.xlu0 %723
        %v725 = vsel %vm245, %v713, 0.0
        %726 = vadd.xlane.f32.xlu0 %v725
        %v727 = vpop.xlane.xlu0 %726
        %v728 = vsel %vm245, %v714, 0.0
        %729 = vadd.xlane.f32.xlu0 %v728
        %v730 = vpop.xlane.xlu0 %729
        %v731 = vsel %vm245, %v715, 0.0
        %732 = vadd.xlane.f32.xlu0 %v731
        %v733 = vpop.xlane.xlu0 %732
        %v734 = vsel %vm245, %v716, 0.0
        %735 = vadd.xlane.f32.xlu0 %v734
        %v736 = vpop.xlane.xlu0 %735
        %v737 = vsel %vm245, %v717, 0.0
        %738 = vadd.xlane.f32.xlu0 %v737
        %v739 = vpop.xlane.xlu0 %738
        %v740 = vsel %vm245, %v718, 0.0
        %741 = vadd.xlane.f32.xlu0 %v740
        %v742 = vpop.xlane.xlu0 %741
        %v743 = vpack.c.bf16 %v721, %v721
        %v744 = vpack.c.bf16 %v724, %v724
        %v745 = vpack.c.bf16 %v727, %v727
        %v746 = vpack.c.bf16 %v730, %v730
        %v747 = vpack.c.bf16 %v733, %v733
        %v748 = vpack.c.bf16 %v736, %v736
        %v749 = vpack.c.bf16 %v739, %v739
        %v750 = vpack.c.bf16 %v742, %v742
        %v760 = vunpack.c.l.s4 839922192
        %v761 = vunpack.c.0.s8 %v760
        %v762 = vlaneseq
        %v763 = vshrl.u32 %v762, 7
        %v764 = vsub.s32 %v761, %v763
        %v765 = vrot.slane %v743, %v764
        %v767 = vunpack.c.l.s4 839922192
        %v768 = vunpack.c.0.s8 %v767
        %v769 = vlaneseq
        %v770 = vshrl.u32 %v769, 7
        %v771 = vsub.s32 %v768, %v770
        %v772 = vrot.slane %v744, %v771
        %v774 = vunpack.c.l.s4 839922192
        %v775 = vunpack.c.0.s8 %v774
        %v776 = vlaneseq
        %v777 = vshrl.u32 %v776, 7
        %v778 = vsub.s32 %v775, %v777
        %v779 = vrot.slane %v745, %v778
        %v781 = vunpack.c.l.s4 839922192
        %v782 = vunpack.c.0.s8 %v781
        %v783 = vlaneseq
        %v784 = vshrl.u32 %v783, 7
        %v785 = vsub.s32 %v782, %v784
        %v786 = vrot.slane %v746, %v785
        %v788 = vunpack.c.l.s4 839922192
        %v789 = vunpack.c.0.s8 %v788
        %v790 = vlaneseq
        %v791 = vshrl.u32 %v790, 7
        %v792 = vsub.s32 %v789, %v791
        %v793 = vrot.slane %v747, %v792
        %v795 = vunpack.c.l.s4 839922192
        %v796 = vunpack.c.0.s8 %v795
        %v797 = vlaneseq
        %v798 = vshrl.u32 %v797, 7
        %v799 = vsub.s32 %v796, %v798
        %v800 = vrot.slane %v748, %v799
        %v802 = vunpack.c.l.s4 839922192
        %v803 = vunpack.c.0.s8 %v802
        %v804 = vlaneseq
        %v805 = vshrl.u32 %v804, 7
        %v806 = vsub.s32 %v803, %v805
        %v807 = vrot.slane %v749, %v806
        %v809 = vunpack.c.l.s4 839922192
        %v810 = vunpack.c.0.s8 %v809
        %v811 = vlaneseq
        %v812 = vshrl.u32 %v811, 7
        %v813 = vsub.s32 %v810, %v812
        %v814 = vrot.slane %v750, %v813
        %v815 = vunpack.c.l.b16 %v765
        %v816 = vunpack.c.l.b16 %v772
        %v817 = vunpack.c.l.b16 %v779
        %v818 = vunpack.c.l.b16 %v786
        %v819 = vunpack.c.l.b16 %v793
        %v820 = vunpack.c.l.b16 %v800
        %v821 = vunpack.c.l.b16 %v807
        %v822 = vunpack.c.l.b16 %v814
        %v823 = vlaneseq
        %v824 = vshrl.u32 %v823, 7
        %v825 = vsub.s32 %v497, %v824
        %v826 = vrot.slane %v815, %v825
        %v827 = vlaneseq
        %v828 = vshrl.u32 %v827, 7
        %v829 = vsub.s32 %v497, %v828
        %v830 = vrot.slane %v816, %v829
        %v831 = vlaneseq
        %v832 = vshrl.u32 %v831, 7
        %v833 = vsub.s32 %v497, %v832
        %v834 = vrot.slane %v817, %v833
        %v835 = vlaneseq
        %v836 = vshrl.u32 %v835, 7
        %v837 = vsub.s32 %v497, %v836
        %v838 = vrot.slane %v818, %v837
        %v839 = vlaneseq
        %v840 = vshrl.u32 %v839, 7
        %v841 = vsub.s32 %v497, %v840
        %v842 = vrot.slane %v819, %v841
        %v843 = vlaneseq
        %v844 = vshrl.u32 %v843, 7
        %v845 = vsub.s32 %v497, %v844
        %v846 = vrot.slane %v820, %v845
        %v847 = vlaneseq
        %v848 = vshrl.u32 %v847, 7
        %v849 = vsub.s32 %v497, %v848
        %v850 = vrot.slane %v821, %v849
        %v851 = vlaneseq
        %v852 = vshrl.u32 %v851, 7
        %v853 = vsub.s32 %v497, %v852
        %v854 = vrot.slane %v822, %v853
        %v855 = vsel %vm530, %v830, %v826
        %v856 = vsel %vm532, %v834, %v855
        %v857 = vsel %vm534, %v838, %v856
        %v858 = vsel %vm536, %v842, %v857
        %v859 = vsel %vm538, %v846, %v858
        %v860 = vsel %vm540, %v850, %v859
        %v861 = vsel %vm542, %v854, %v860
        %v862 = vpack.c.b16 %v861, %v861
        %s864 = scalar_lea.vmem %s233, 8 [#allocation5]
        %865 = vst.msk [vmem:[%s864] sm:$0xf] %vm546, %v862
        %v866 = vlaneseq
        %v867 = vshrl.u32 %v866, 7
        %v868 = vsub.s32 3, %v867
        %v869 = vrot.slane %v379, %v868
        %v870 = vmul.f32 %v371, %v869
        %v871 = vmul.f32 %v372, %v869
        %v872 = vmul.f32 %v373, %v869
        %v873 = vmul.f32 %v374, %v869
        %v874 = vmul.f32 %v375, %v869
        %v875 = vmul.f32 %v376, %v869
        %v876 = vmul.f32 %v377, %v869
        %v877 = vmul.f32 %v378, %v869
        %v878 = vsel %vm245, %v870, 0.0
        %879 = vadd.xlane.f32.xlu0 %v878
        %v880 = vpop.xlane.xlu0 %879
        %v881 = vsel %vm245, %v871, 0.0
        %882 = vadd.xlane.f32.xlu0 %v881
        %v883 = vpop.xlane.xlu0 %882
        %v884 = vsel %vm245, %v872, 0.0
        %885 = vadd.xlane.f32.xlu0 %v884
        %v886 = vpop.xlane.xlu0 %885
        %v887 = vsel %vm245, %v873, 0.0
        %888 = vadd.xlane.f32.xlu0 %v887
        %v889 = vpop.xlane.xlu0 %888
        %v890 = vsel %vm245, %v874, 0.0
        %891 = vadd.xlane.f32.xlu0 %v890
        %v892 = vpop.xlane.xlu0 %891
        %v893 = vsel %vm245, %v875, 0.0
        %894 = vadd.xlane.f32.xlu0 %v893
        %v895 = vpop.xlane.xlu0 %894
        %v896 = vsel %vm245, %v876, 0.0
        %897 = vadd.xlane.f32.xlu0 %v896
        %v898 = vpop.xlane.xlu0 %897
        %v899 = vsel %vm245, %v877, 0.0
        %900 = vadd.xlane.f32.xlu0 %v899
        %v901 = vpop.xlane.xlu0 %900
        %v902 = vpack.c.bf16 %v880, %v880
        %v903 = vpack.c.bf16 %v883, %v883
        %v904 = vpack.c.bf16 %v886, %v886
        %v905 = vpack.c.bf16 %v889, %v889
        %v906 = vpack.c.bf16 %v892, %v892
        %v907 = vpack.c.bf16 %v895, %v895
        %v908 = vpack.c.bf16 %v898, %v898
        %v909 = vpack.c.bf16 %v901, %v901
        %v919 = vunpack.c.l.s4 839922192
        %v920 = vunpack.c.0.s8 %v919
        %v921 = vlaneseq
        %v922 = vshrl.u32 %v921, 7
        %v923 = vsub.s32 %v920, %v922
        %v924 = vrot.slane %v902, %v923
        %v926 = vunpack.c.l.s4 839922192
        %v927 = vunpack.c.0.s8 %v926
        %v928 = vlaneseq
        %v929 = vshrl.u32 %v928, 7
        %v930 = vsub.s32 %v927, %v929
        %v931 = vrot.slane %v903, %v930
        %v933 = vunpack.c.l.s4 839922192
        %v934 = vunpack.c.0.s8 %v933
        %v935 = vlaneseq
        %v936 = vshrl.u32 %v935, 7
        %v937 = vsub.s32 %v934, %v936
        %v938 = vrot.slane %v904, %v937
        %v940 = vunpack.c.l.s4 839922192
        %v941 = vunpack.c.0.s8 %v940
        %v942 = vlaneseq
        %v943 = vshrl.u32 %v942, 7
        %v944 = vsub.s32 %v941, %v943
        %v945 = vrot.slane %v905, %v944
        %v947 = vunpack.c.l.s4 839922192
        %v948 = vunpack.c.0.s8 %v947
        %v949 = vlaneseq
        %v950 = vshrl.u32 %v949, 7
        %v951 = vsub.s32 %v948, %v950
        %v952 = vrot.slane %v906, %v951
        %v954 = vunpack.c.l.s4 839922192
        %v955 = vunpack.c.0.s8 %v954
        %v956 = vlaneseq
        %v957 = vshrl.u32 %v956, 7
        %v958 = vsub.s32 %v955, %v957
        %v959 = vrot.slane %v907, %v958
        %v961 = vunpack.c.l.s4 839922192
        %v962 = vunpack.c.0.s8 %v961
        %v963 = vlaneseq
        %v964 = vshrl.u32 %v963, 7
        %v965 = vsub.s32 %v962, %v964
        %v966 = vrot.slane %v908, %v965
        %v968 = vunpack.c.l.s4 839922192
        %v969 = vunpack.c.0.s8 %v968
        %v970 = vlaneseq
        %v971 = vshrl.u32 %v970, 7
        %v972 = vsub.s32 %v969, %v971
        %v973 = vrot.slane %v909, %v972
        %v974 = vunpack.c.l.b16 %v924
        %v975 = vunpack.c.l.b16 %v931
        %v976 = vunpack.c.l.b16 %v938
        %v977 = vunpack.c.l.b16 %v945
        %v978 = vunpack.c.l.b16 %v952
        %v979 = vunpack.c.l.b16 %v959
        %v980 = vunpack.c.l.b16 %v966
        %v981 = vunpack.c.l.b16 %v973
        %v982 = vlaneseq
        %v983 = vshrl.u32 %v982, 7
        %v984 = vsub.s32 %v497, %v983
        %v985 = vrot.slane %v974, %v984
        %v986 = vlaneseq
        %v987 = vshrl.u32 %v986, 7
        %v988 = vsub.s32 %v497, %v987
        %v989 = vrot.slane %v975, %v988
        %v990 = vlaneseq
        %v991 = vshrl.u32 %v990, 7
        %v992 = vsub.s32 %v497, %v991
        %v993 = vrot.slane %v976, %v992
        %v994 = vlaneseq
        %v995 = vshrl.u32 %v994, 7
        %v996 = vsub.s32 %v497, %v995
        %v997 = vrot.slane %v977, %v996
        %v998 = vlaneseq
        %v999 = vshrl.u32 %v998, 7
        %v1000 = vsub.s32 %v497, %v999
        %v1001 = vrot.slane %v978, %v1000
        %v1002 = vlaneseq
        %v1003 = vshrl.u32 %v1002, 7
        %v1004 = vsub.s32 %v497, %v1003
        %v1005 = vrot.slane %v979, %v1004
        %v1006 = vlaneseq
        %v1007 = vshrl.u32 %v1006, 7
        %v1008 = vsub.s32 %v497, %v1007
        %v1009 = vrot.slane %v980, %v1008
        %v1010 = vlaneseq
        %v1011 = vshrl.u32 %v1010, 7
        %v1012 = vsub.s32 %v497, %v1011
        %v1013 = vrot.slane %v981, %v1012
        %v1014 = vsel %vm530, %v989, %v985
        %v1015 = vsel %vm532, %v993, %v1014
        %v1016 = vsel %vm534, %v997, %v1015
        %v1017 = vsel %vm536, %v1001, %v1016
        %v1018 = vsel %vm538, %v1005, %v1017
        %v1019 = vsel %vm540, %v1009, %v1018
        %v1020 = vsel %vm542, %v1013, %v1019
        %v1021 = vpack.c.b16 %v1020, %v1020
        %s1023 = scalar_lea.vmem %s233, 12 [#allocation5]
        %1024 = vst.msk [vmem:[%s1023] sm:$0xf] %vm546, %v1021
        %s1025 = sand.u32 %s134, 1
        %s1026 = scalar_lea.sflag [#allocation4], %s1025
        %s1027 = sand.u32 %s134, 1
        %s1028 = smul.addr %s1027, 16
        %s1029 = scalar_lea.vmem [#allocation5], %s1028
        // Predicated region
        $region41: #{tpu_custom_call.1} parent=35 // pred_check
          %p1030 = pneg %p144
        $region42: #{tpu_custom_call.1} parent=35 // pred_check_branch
          %1032 = sbr.rel (%p1030) target = $region44
        $region43: #{tpu_custom_call.1} parent=35 // pred_region
          %s1034 = ssub.s32 256, 256
          %1035 = vsyncadd %s1026, %s1034
          %s1036 = smul.addr %s25, 4
          %s1037 = sadd.s32 %s26, %s1036
          %s1038 = smul.addr %s1037, 64
          %s1039 = scalar_lea.hbm %s4, %s1038
          %s1040 = sshll.u32 %s1029, 4
          %s1041 = int_to_ptr.vmem [resolvable:$true] %s1040
          %1046 = dma.vmem_to_hbm [thread:$0]  %s1041, 256, %s1039, %s1026, 64, 64, 4
        $region44: #{tpu_custom_call.1} parent=35 // pred_fallthru
          _
      $region36: #{tpu_custom_call.1} parent=5 // pred_fallthru
        _
      %p1047 = scmp.le.s32.totalorder 2, %s16
      // Predicated region
      $region45: #{tpu_custom_call.1} parent=5 // pred_check
        %p1048 = pneg %p1047
      $region46: #{tpu_custom_call.1} parent=5 // pred_check_branch
        %1050 = sbr.rel (%p1048) target = $region48
      $region47: #{tpu_custom_call.1} parent=5 // pred_region
        %s1051 = ssub.s32 %s16, 2
        // Predicated region
        $region49: #{tpu_custom_call.1} parent=47 // pred_check
          %p1052 = pneg %p150
        $region50: #{tpu_custom_call.1} parent=47 // pred_check_branch
          %1054 = sbr.rel (%p1052) target = $region52
        $region51: #{tpu_custom_call.1} parent=47 // pred_region
          %s1055 = sand.u32 %s135, 1
          %s1056 = scalar_lea.sflag [#allocation4], %s1055
          %s1057 = sand.u32 %s135, 1
          %s1058 = smul.addr %s1057, 16
          %s1059 = scalar_lea.vmem [#allocation5], %s1058
          %1060 = dma.done %s1056, 256
        $region52: #{tpu_custom_call.1} parent=47 // pred_fallthru
          _
      $region48: #{tpu_custom_call.1} parent=5 // pred_fallthru
        _
    $region6: #{tpu_custom_call.1} parent=1 // loop_footer
      %s20 = sadd.s32 1, %s16
    $region7: #{tpu_custom_call.1} parent=1 // loop_footer_branch
      %15 = sbr.rel target = $region3
    $region8: #{tpu_custom_call.1} parent=1 // loop_exit
      _
    %1061 = vsyncpa [#allocation3], 1
    %s1062 = scalar_lea.sflag [#allocation3], 1
    %1063 = vsyncpa %s1062, 1
    %1064 = vsyncpa [#allocation4], 1
    %s1065 = scalar_lea.sflag [#allocation4], 1
    %1066 = vsyncpa %s1065, 1

</llo_original>
